<compile_context>
chip_gen: v6e
topology: v6e:2x2x1
jax: 0.10.0
libtpu: 0.0.40
codegen_flags: <defaults>
</compile_context>

<pallas_src>
import functools

import jax
import jax.numpy as jnp
import numpy as np
from jax.experimental import pallas as pl
from jax.experimental.pallas import tpu as pltpu


DEFAULT_TILE_NY = 2048   # sweep 1024-4096 per generation (v7x prefers the top end)


# ---------------------------------------------------------------------------
# Helpers
# ---------------------------------------------------------------------------
def _round_up(x, m):
    return (x + m - 1) // m * m


def _pick_tile(ny_pad, tile_ny):
    """Largest multiple of 128 <= tile_ny that divides ny_pad (ny_pad % 128 == 0)."""
    t = min(max(tile_ny, 128), ny_pad)
    t -= t % 128
    while ny_pad % t:
        t -= 128
    return t


def _vmem_limit(bytes_needed):
    # Tight limit: double-buffered need + a few MiB headroom (v7x VMEM is 64 MiB).
    return int(min(max(2 * bytes_needed + (4 << 20), 8 << 20), 48 << 20))


# ---------------------------------------------------------------------------
# Kernels
# ---------------------------------------------------------------------------
def _gru_gates(e, h, w, b):
    """PyTorch nn.GRUCell step with one fused matmul.

    e, h : (B, D)   f32
    w    : (2D, 4D) bf16, column blocks [r | z | n_x | n_h]:
              rows 0:D  -> [W_ih_r^T | W_ih_z^T | W_ih_n^T |    0     ]
              rows D:2D -> [W_hh_r^T | W_hh_z^T |    0     | W_hh_n^T ]
    b    : (1, 4D) f32 = [b_ih_r+b_hh_r | b_ih_z+b_hh_z | b_ih_n | b_hh_n]
           (b_hh_n stays separate: it sits inside the reset-gate product)
    """
    d = h.shape[1]
    eh = jnp.concatenate([e, h], axis=1).astype(jnp.bfloat16)   # (B, 2D)
    g = jnp.dot(eh, w, preferred_element_type=jnp.float32) + b  # (B, 4D), f32 acc
    r = jax.nn.sigmoid(g[:, :d])
    z = jax.nn.sigmoid(g[:, d:2 * d])
    n = jnp.tanh(g[:, 2 * d:3 * d] + r * g[:, 3 * d:])
    return (1.0 - z) * n + z * h


def _gru_kernel(e_ref, h_ref, w_ref, b_ref, xh_ref):
    xh_ref[...] = _gru_gates(e_ref[...], h_ref[...], w_ref[...],
                             b_ref[...]).astype(xh_ref.dtype)


def _score_kernel(xh_ref, ot_ref, by_ref, sc_ref):
    """score_items: (B, D) @ (D, tile) + bias.  One grid step per NY tile,
    no carried state -> the NY axis is 'parallel' (2 TCs on v7x)."""
    xh_b = xh_ref[...].astype(jnp.bfloat16)
    sc = jnp.dot(xh_b, ot_ref[...], preferred_element_type=jnp.float32)
    sc_ref[...] = sc + by_ref[...]


# ---------------------------------------------------------------------------
# pallas_call wrappers (NOT individually jitted; the whole forward is jitted)
# ---------------------------------------------------------------------------
def gru_cell(e, h, w_cat, b_cat):
    batch, dim = h.shape
    need = ((3 * batch * dim + 4 * dim) * 4
            + w_cat.size * w_cat.dtype.itemsize)
    return pl.pallas_call(
        _gru_kernel,
        out_shape=jax.ShapeDtypeStruct((batch, dim), jnp.float32),
        grid=(1,),
        in_specs=[
            pl.BlockSpec((batch, dim), lambda i: (0, 0)),        # E
            pl.BlockSpec((batch, dim), lambda i: (0, 0)),        # H
            pl.BlockSpec((2 * dim, 4 * dim), lambda i: (0, 0)),  # W_cat (bf16)
            pl.BlockSpec((1, 4 * dim), lambda i: (0, 0)),        # fused bias row
        ],
        out_specs=pl.BlockSpec((batch, dim), lambda i: (0, 0)),
        compiler_params=pltpu.CompilerParams(
            dimension_semantics=("arbitrary",),
            vmem_limit_bytes=_vmem_limit(need)),
    )(e, h, w_cat, b_cat)


def score_items(xh, o_t, b_row, *, tile_ny=DEFAULT_TILE_NY):
    """scores = Xh @ O^T + By, with O^T streamed as (D, NY_pad) bf16 column tiles.

    xh   : (B, D)       f32 (cast to bf16 in-kernel, resident across tiles)
    o_t  : (D, NY_pad)  bf16 pre-transposed item block (NY_pad % 128 == 0)
    b_row: (1, NY_pad)  f32 lane-dense bias row
    """
    batch, dim = xh.shape
    ny_pad = o_t.shape[1]
    tile = _pick_tile(ny_pad, tile_ny)
    n_tiles = ny_pad // tile

    need = (batch * dim * 4                       # resident Xh
            + dim * tile * 2                      # O^T tile (bf16)
            + tile * 4                            # bias tile
            + batch * tile * 4)                   # score tile
    return pl.pallas_call(
        _score_kernel,
        out_shape=jax.ShapeDtypeStruct((batch, ny_pad), jnp.float32),
        grid=(n_tiles,),
        in_specs=[
            pl.BlockSpec((batch, dim), lambda j: (0, 0)),   # Xh (resident)
            pl.BlockSpec((dim, tile), lambda j: (0, j)),    # O^T tile (bf16, streamed)
            pl.BlockSpec((1, tile), lambda j: (0, j)),      # lane-dense bias tile
        ],
        out_specs=pl.BlockSpec((batch, tile), lambda j: (0, j)),
        compiler_params=pltpu.CompilerParams(
            dimension_semantics=("parallel",),              # shards NY across TCs (v7x)
            vmem_limit_bytes=_vmem_limit(need)),
    )(xh, o_t, b_row)


# ---------------------------------------------------------------------------
# Parameter init (mimics _reset_weights_to_compatibility_mode, default config)
# ---------------------------------------------------------------------------
def init_params(n_items, dim, seed=42, table_pad=DEFAULT_TILE_NY):
    rng = np.random.RandomState(seed)

    def init_mat(shape):
        sigma = np.sqrt(6.0 / (shape[0] + shape[1]))
        return (rng.rand(*shape).astype("float32") * 2 * sigma - sigma)

    n_input = dim  # constrained_embedding -> n_input = layers[-1]
    w_ih = [init_mat((n_input, dim)) for _ in range(3)]   # E-side gate mats
    w_hh = [init_mat((dim, dim)) for _ in range(3)]       # H-side gate mats

    # Fused gate weight (2D, 4D): column blocks [r | z | n_x | n_h]
    w_cat = np.zeros((2 * dim, 4 * dim), np.float32)
    w_cat[:dim, 0 * dim:1 * dim] = w_ih[0].T
    w_cat[:dim, 1 * dim:2 * dim] = w_ih[1].T
    w_cat[:dim, 2 * dim:3 * dim] = w_ih[2].T
    w_cat[dim:, 0 * dim:1 * dim] = w_hh[0].T
    w_cat[dim:, 1 * dim:2 * dim] = w_hh[1].T
    w_cat[dim:, 3 * dim:4 * dim] = w_hh[2].T

    wy = init_mat((n_items + 1, dim))
    wy[n_items, :] = 0.0                       # padding_idx row
    by = np.zeros((n_items + 1,), np.float32)  # By is zero-initialized

    # Pre-transposed bf16 item table, lane-padded so the default score tile divides.
    pad_n = _round_up(n_items + 1, table_pad)
    wy_t = np.zeros((dim, pad_n), np.float32)
    wy_t[:, :n_items + 1] = wy.T
    by_row_pad = np.zeros((1, pad_n), np.float32)
    by_row_pad[:, :n_items + 1] = by[None, :]

    return {
        "W_cat": jnp.asarray(w_cat, dtype=jnp.bfloat16),   # bf16 gate weight
        "b_cat": jnp.zeros((1, 4 * dim), jnp.float32),     # [b_r | b_z | b_ih_n | b_hh_n]
        "Wy": jnp.asarray(wy),                             # f32 table (gathers / O output)
        "Wy_T": jnp.asarray(wy_t, dtype=jnp.bfloat16),     # (D, pad_n) bf16 streamed table
        "By": jnp.asarray(by),                             # (N+1,) f32 output bias
        "By_row_pad": jnp.asarray(by_row_pad),             # (1, pad_n) f32 bias row
    }


# ---------------------------------------------------------------------------
# GRU4RecModel.forward (constrained_embedding=True, one GRU layer, inference)
# ---------------------------------------------------------------------------
@functools.partial(jax.jit, static_argnames=("return_hidden", "return_scores"))
def gru4rec_forward(params, X, H, Y=None, return_hidden=True, return_scores=False):
    """H is a list with one (B, D) hidden state; the updated state is returned as a
    new list (no in-place aliasing; callers keep their old H intact)."""
    wy = params["Wy"]
    n_total = wy.shape[0]                     # n_items + 1 (incl. padding row)
    padding_idx = n_total - 1

    # embed_constrained: shared Wy lookup for E (glue gather in plain JAX).
    E = wy[X]                                 # (B, D) f32

    # GRUCell hidden step (tiny kernel; Xh is the new hidden state).
    Xh = gru_cell(E, H[0], params["W_cat"], params["b_cat"])
    H_new = [Xh]

    if return_hidden and not return_scores:
        if Y is not None:
            O = wy[Y]                         # (NY, D) f32, matches PyTorch Wy(Y)
            B_col = params["By"][Y][:, None]  # (NY, 1),      matches PyTorch By(Y)
        else:
            O = wy
            B_col = params["By"][:, None]
        return (Xh, O, B_col), H_new

    # ---- score_items ------------------------------------------------------
    if Y is not None:
        ny = Y.shape[0]
        ny_pad = _round_up(max(ny, 128), 128)
        # Pad the INDEX vector with padding_idx (zero Wy row / By entry): the gather
        # itself emits lane-padded operands -> no jnp.pad copy of the item block.
        y_pad = jnp.full((ny_pad,), padding_idx, dtype=Y.dtype).at[:ny].set(Y)
        o_t = params["Wy_T"][:, y_pad]        # (D, ny_pad) bf16
        b_row = params["By"][y_pad][None, :]  # (1, ny_pad) f32
        scores = score_items(Xh, o_t, b_row)[:, :ny]
    else:
        # Full-catalog scoring: stream the pre-transposed bf16 table directly,
        # no gather / materialized copy at all.
        scores = score_items(Xh, params["Wy_T"], params["By_row_pad"])[:, :n_total]

    if return_hidden:
        return (Xh, scores), H_new
    return scores, H_new


# ---------------------------------------------------------------------------
if __name__ == "__main__":
    n_items = 50
    dim = 128        # layers = [128]
    batch = 8
    n_y = 16         # number of (target + sampled) items

    params = init_params(n_items, dim, seed=42)

    key = jax.random.PRNGKey(0)
    kx, ky, kh = jax.random.split(key, 3)
    X = jax.random.randint(kx, (batch,), 0, n_items, dtype=jnp.int32)
    Y = jax.random.randint(ky, (n_y,), 0, n_items, dtype=jnp.int32)
    H = [jax.random.normal(kh, (batch, dim), dtype=jnp.float32) * 0.1]

    # Default forward semantics: return_hidden=True, return_scores=False -> (Xh, O, B)
    (Xh, O, B_col), H1 = gru4rec_forward(params, X, H, Y,
                                         return_hidden=True, return_scores=False)
    # GRU + sampled-item scoring
    (Xh2, scores), H2 = gru4rec_forward(params, X, H, Y,
                                        return_hidden=True, return_scores=True)
    # scores-only path
    scores_only, _ = gru4rec_forward(params, X, H, Y,
                                     return_hidden=False, return_scores=False)
    # full-catalog scoring (Y=None): streams the bf16 table, no gather
    (Xh3, scores_all), _ = gru4rec_forward(params, X, H, None,
                                           return_hidden=True, return_scores=True)
    jax.block_until_ready((Xh, O, B_col, Xh2, scores, scores_only, Xh3, scores_all))

    # ---- fp32 reference (plain JAX); kernels use bf16 matmul operands, so the
    # ---- comparison tolerance covers bf16 rounding.
    Wc = params["W_cat"].astype(jnp.float32)
    E_ref = params["Wy"][X]
    EH = jnp.concatenate([E_ref, H[0]], axis=1)
    g = EH @ Wc + params["b_cat"]
    d = dim
    r = jax.nn.sigmoid(g[:, :d])
    z = jax.nn.sigmoid(g[:, d:2 * d])
    n = jnp.tanh(g[:, 2 * d:3 * d] + r * g[:, 3 * d:])
    Xh_ref = (1.0 - z) * n + z * H[0]
    scores_ref = Xh_ref @ params["Wy"][Y].T + params["By"][Y][None, :]
    scores_all_ref = Xh_ref @ params["Wy"].T + params["By"][None, :]

    assert jnp.allclose(Xh, Xh_ref, atol=2e-2, rtol=2e-2), "GRU cell mismatch"
    assert jnp.allclose(Xh2, Xh, atol=0, rtol=0), "Xh not deterministic across paths"
    assert jnp.allclose(H1[0], Xh, atol=0, rtol=0), "hidden-state update mismatch"
    assert jnp.allclose(scores, scores_ref, atol=2e-2, rtol=2e-2), "score mismatch"
    assert jnp.allclose(scores_only, scores_ref, atol=2e-2, rtol=2e-2), "score-only mismatch"
    assert jnp.allclose(scores_all, scores_all_ref, atol=2e-2, rtol=2e-2), "full-catalog mismatch"
    assert jnp.allclose(O, params["Wy"][Y]), "O embedding mismatch"
    assert B_col.shape == (n_y, 1) and jnp.allclose(B_col, 0.0), "By(Y) mismatch"

    # TODO(synk): loss functions (xe_loss_with_softmax / bpr-max / top1) and dropout are
    # training-only and not part of forward(); they are not implemented as kernels here.
    print("KERNEL_OK")
</pallas_src>

<mosaic_0001>
module attributes {stable_mosaic.version = 11 : i64} {
  func.func @_gru_kernel(%arg0: i32, %arg1: memref<8x128xf32, #tpu.memory_space<vmem>>, %arg2: memref<8x128xf32, #tpu.memory_space<vmem>>, %arg3: memref<256x512xbf16, #tpu.memory_space<vmem>>, %arg4: memref<1x512xf32, #tpu.memory_space<vmem>>, %arg5: memref<8x128xf32, #tpu.memory_space<vmem>>) attributes {dimension_semantics = [#tpu.dimension_semantics<arbitrary>], iteration_bounds = array<i64: 1>, scalar_prefetch = 0 : i64, scratch_operands = 0 : i64, tpu.core_type = #tpu.core_type<tc>, window_params = [{pipeline_mode = #tpu.pipeline_mode<synchronous>, transform_indices = @transform_0, window_bounds = array<i64: 8, 128>}, {pipeline_mode = #tpu.pipeline_mode<synchronous>, transform_indices = @transform_1, window_bounds = array<i64: 8, 128>}, {pipeline_mode = #tpu.pipeline_mode<synchronous>, transform_indices = @transform_2, window_bounds = array<i64: 256, 512>}, {pipeline_mode = #tpu.pipeline_mode<synchronous>, transform_indices = @transform_3, window_bounds = array<i64: 1, 512>}, {pipeline_mode = #tpu.pipeline_mode<synchronous>, transform_indices = @transform_4, window_bounds = array<i64: 8, 128>}]} {
    %c0 = arith.constant 0 : index
    %c0_0 = arith.constant 0 : index
    %0 = vector.load %arg1[%c0, %c0_0] : memref<8x128xf32, #tpu.memory_space<vmem>>, vector<8x128xf32>
    %c0_1 = arith.constant 0 : index
    %c0_2 = arith.constant 0 : index
    %1 = vector.load %arg2[%c0_1, %c0_2] : memref<8x128xf32, #tpu.memory_space<vmem>>, vector<8x128xf32>
    %c0_3 = arith.constant 0 : index
    %c0_4 = arith.constant 0 : index
    %2 = vector.load %arg3[%c0_3, %c0_4] : memref<256x512xbf16, #tpu.memory_space<vmem>>, vector<256x512xbf16>
    %c0_5 = arith.constant 0 : index
    %c0_6 = arith.constant 0 : index
    %3 = vector.load %arg4[%c0_5, %c0_6] : memref<1x512xf32, #tpu.memory_space<vmem>>, vector<1x512xf32>
    %4 = tpu.concatenate %0, %1 in 1 : vector<8x128xf32>, vector<8x128xf32> -> vector<8x256xf32>
    %5 = arith.truncf %4 : vector<8x256xf32> to vector<8x256xbf16>
    %cst = arith.constant dense<0.000000e+00> : vector<8x512xf32>
    %6 = tpu.matmul %5, %2, %cst {dimension_numbers = #tpu.dot_dimension_numbers<[1], [0], [0], [1], [0, 0, 1, 1], [], []>} : vector<8x256xbf16>, vector<256x512xbf16>, vector<8x512xf32> -> vector<8x512xf32>
    %7 = vector.broadcast %3 : vector<1x512xf32> to vector<8x512xf32>
    %8 = arith.addf %6, %7 : vector<8x512xf32>
    %9 = vector.extract_strided_slice %8 {offsets = [0, 0], sizes = [8, 128], strides = [1, 1]} : vector<8x512xf32> to vector<8x128xf32>
    %10 = arith.negf %9 : vector<8x128xf32>
    %11 = math.exp %10 : vector<8x128xf32>
    %cst_7 = arith.constant 1.000000e+00 : f32
    %12 = vector.broadcast %cst_7 : f32 to vector<8x128xf32>
    %13 = arith.addf %12, %11 : vector<8x128xf32>
    %14 = arith.divf %12, %13 : vector<8x128xf32>
    %15 = vector.extract_strided_slice %8 {offsets = [0, 128], sizes = [8, 128], strides = [1, 1]} : vector<8x512xf32> to vector<8x128xf32>
    %16 = arith.negf %15 : vector<8x128xf32>
    %17 = math.exp %16 : vector<8x128xf32>
    %cst_8 = arith.constant 1.000000e+00 : f32
    %18 = vector.broadcast %cst_8 : f32 to vector<8x128xf32>
    %19 = arith.addf %18, %17 : vector<8x128xf32>
    %20 = arith.divf %18, %19 : vector<8x128xf32>
    %21 = vector.extract_strided_slice %8 {offsets = [0, 256], sizes = [8, 128], strides = [1, 1]} : vector<8x512xf32> to vector<8x128xf32>
    %22 = vector.extract_strided_slice %8 {offsets = [0, 384], sizes = [8, 128], strides = [1, 1]} : vector<8x512xf32> to vector<8x128xf32>
    %23 = arith.mulf %14, %22 : vector<8x128xf32>
    %24 = arith.addf %21, %23 : vector<8x128xf32>
    %25 = math.tanh %24 : vector<8x128xf32>
    %cst_9 = arith.constant 1.000000e+00 : f32
    %26 = vector.broadcast %cst_9 : f32 to vector<8x128xf32>
    %27 = arith.subf %26, %20 : vector<8x128xf32>
    %28 = arith.mulf %27, %25 : vector<8x128xf32>
    %29 = arith.mulf %20, %1 : vector<8x128xf32>
    %30 = arith.addf %28, %29 : vector<8x128xf32>
    %c0_10 = arith.constant 0 : index
    %c0_11 = arith.constant 0 : index
    %31 = vector.load %arg5[%c0_10, %c0_11] : memref<8x128xf32, #tpu.memory_space<vmem>>, vector<8x128xf32>
    tpu.vector_store %arg5[%c0_10, %c0_11], %30 {strides = array<i32>} : memref<8x128xf32, #tpu.memory_space<vmem>>, vector<8x128xf32>,
    return
  }
  func.func @transform_0(%arg0: i32) -> (i32, i32) {
    %c0_i32 = arith.constant 0 : i32
    %c0_i32_0 = arith.constant 0 : i32
    %c0_i32_1 = arith.constant 0 : i32
    return %c0_i32, %c0_i32_0 : i32, i32
  }
  func.func @transform_1(%arg0: i32) -> (i32, i32) {
    %c0_i32 = arith.constant 0 : i32
    %c0_i32_0 = arith.constant 0 : i32
    %c0_i32_1 = arith.constant 0 : i32
    return %c0_i32, %c0_i32_0 : i32, i32
  }
  func.func @transform_2(%arg0: i32) -> (i32, i32) {
    %c0_i32 = arith.constant 0 : i32
    %c0_i32_0 = arith.constant 0 : i32
    %c0_i32_1 = arith.constant 0 : i32
    return %c0_i32, %c0_i32_0 : i32, i32
  }
  func.func @transform_3(%arg0: i32) -> (i32, i32) {
    %c0_i32 = arith.constant 0 : i32
    %c0_i32_0 = arith.constant 0 : i32
    %c0_i32_1 = arith.constant 0 : i32
    return %c0_i32, %c0_i32_0 : i32, i32
  }
  func.func @transform_4(%arg0: i32) -> (i32, i32) {
    %c0_i32 = arith.constant 0 : i32
    %c0_i32_0 = arith.constant 0 : i32
    %c0_i32_1 = arith.constant 0 : i32
    return %c0_i32, %c0_i32_0 : i32, i32
  }
}

</mosaic_0001>

<llo_original>
// kernel: gru4rec_forward.1
$region0: #{gru4rec_forward.1}
  #allocation0 [shape = 'u32[]', space=smem, size = 0x4, offset = 0x4, fixed_abs, tag = 'smem constant byte address 0x4 - core index']
  #allocation1 [shape = 'u32[144,128]{1,0:T(1,128)}', space=vmem, size = 0x12000, scoped, tag = 'internal scratch']
  %s0 = inlined_call_operand.vmem [shape: f32[8,128], index: 0, kind: input, shape index: {}]
  %s1 = inlined_call_operand.vmem [shape: f32[8,128], index: 1, kind: input, shape index: {}]
  %s2 = inlined_call_operand.hbm [shape: bf16[256,512], index: 2, kind: input, shape index: {}]
  %s3 = inlined_call_operand.vmem [shape: f32[1,512], index: 3, kind: input, shape index: {}]
  %s4 = inlined_call_operand.vmem [shape: f32[8,128], index: 4, kind: output, shape index: {}]
  %s5 = sld [smem:[#allocation0]]
  $region30: #{gru4rec_forward.1} parent=0
    _
  %s7 = ssub.s32 1, %s5
  %s8 = scalar_select 0, %s7, %s5
  $region1: #{gru4rec_forward.1} parent=0
    #allocation2 [shape = 'u8[262144]{0}', space=vmem, size = 0x40000, scoped, tag = 'input window, operand 2, single buffered']
    #allocation3 [shape = 's32[1]{0}', space=sflag, size = 0x4, scoped, tag = 'scoped memory for gru4rec_forward.1']
    %9 = vsyncpa [#allocation3], 0
    // Predicated region
    $region2: #{gru4rec_forward.1} parent=1 // pred_check
      _
    $region3: #{gru4rec_forward.1} parent=1 // pred_check_branch
      %11 = sbr.rel (0) target = $region5
    $region4: #{gru4rec_forward.1} parent=1 // pred_region
      _
    $region5: #{gru4rec_forward.1} parent=1 // pred_fallthru
      _
    // Predicated region
    $region6: #{gru4rec_forward.1} parent=1 // pred_check
      _
    $region7: #{gru4rec_forward.1} parent=1 // pred_check_branch
      %13 = sbr.rel (0) target = $region9
    $region8: #{gru4rec_forward.1} parent=1 // pred_region
      _
    $region9: #{gru4rec_forward.1} parent=1 // pred_fallthru
      _
    // Predicated region
    $region10: #{gru4rec_forward.1} parent=1 // pred_check
      _
    $region11: #{gru4rec_forward.1} parent=1 // pred_check_branch
      %15 = sbr.rel (0) target = $region13
    $region12: #{gru4rec_forward.1} parent=1 // pred_region
      %s17 = ssub.s32 8192, 8192
      %18 = vsyncadd [#allocation3], %s17
      %s19 = sshll.u32 [#allocation2], 4
      %s20 = int_to_ptr.vmem [resolvable:$true] %s19
      %25 = dma.hbm_to_vmem [thread:$0]  %s2, 8192, %s20, [#allocation3], 256, 256, 16
    $region13: #{gru4rec_forward.1} parent=1 // pred_fallthru
      _
    // Predicated region
    $region14: #{gru4rec_forward.1} parent=1 // pred_check
      _
    $region15: #{gru4rec_forward.1} parent=1 // pred_check_branch
      %27 = sbr.rel (0) target = $region17
    $region16: #{gru4rec_forward.1} parent=1 // pred_region
      _
    $region17: #{gru4rec_forward.1} parent=1 // pred_fallthru
      _
    // Predicated region
    $region18: #{gru4rec_forward.1} parent=1 // pred_check
      _
    $region19: #{gru4rec_forward.1} parent=1 // pred_check_branch
      %29 = sbr.rel (0) target = $region21
    $region20: #{gru4rec_forward.1} parent=1 // pred_region
      %30 = dma.done [#allocation3], 8192
    $region21: #{gru4rec_forward.1} parent=1 // pred_fallthru
      _
    %v31 = vld [vmem:[%s0] sm:$0xff]
    %v32 = vld [vmem:[%s1] sm:$0xff]
    %v33 = vld [vmem:[#allocation2] sm:$0xff]
    %v34 = vld [vmem:[#allocation2 + $0x8] sm:$0xff]
    %v35 = vld [vmem:[#allocation2 + $0x10] sm:$0xff]
    %v36 = vld [vmem:[#allocation2 + $0x18] sm:$0xff]
    %v37 = vld [vmem:[#allocation2 + $0x20] sm:$0xff]
    %v38 = vld [vmem:[#allocation2 + $0x28] sm:$0xff]
    %v39 = vld [vmem:[#allocation2 + $0x30] sm:$0xff]
    %v40 = vld [vmem:[#allocation2 + $0x38] sm:$0xff]
    %v41 = vld [vmem:[#allocation2 + $0x40] sm:$0xff]
    %v42 = vld [vmem:[#allocation2 + $0x48] sm:$0xff]
    %v43 = vld [vmem:[#allocation2 + $0x50] sm:$0xff]
    %v44 = vld [vmem:[#allocation2 + $0x58] sm:$0xff]
    %v45 = vld [vmem:[#allocation2 + $0x60] sm:$0xff]
    %v46 = vld [vmem:[#allocation2 + $0x68] sm:$0xff]
    %v47 = vld [vmem:[#allocation2 + $0x70] sm:$0xff]
    %v48 = vld [vmem:[#allocation2 + $0x78] sm:$0xff]
    %v49 = vld [vmem:[#allocation2 + $0x80] sm:$0xff]
    %v50 = vld [vmem:[#allocation2 + $0x88] sm:$0xff]
    %v51 = vld [vmem:[#allocation2 + $0x90] sm:$0xff]
    %v52 = vld [vmem:[#allocation2 + $0x98] sm:$0xff]
    %v53 = vld [vmem:[#allocation2 + $0xa0] sm:$0xff]
    %v54 = vld [vmem:[#allocation2 + $0xa8] sm:$0xff]
    %v55 = vld [vmem:[#allocation2 + $0xb0] sm:$0xff]
    %v56 = vld [vmem:[#allocation2 + $0xb8] sm:$0xff]
    %v57 = vld [vmem:[#allocation2 + $0xc0] sm:$0xff]
    %v58 = vld [vmem:[#allocation2 + $0xc8] sm:$0xff]
    %v59 = vld [vmem:[#allocation2 + $0xd0] sm:$0xff]
    %v60 = vld [vmem:[#allocation2 + $0xd8] sm:$0xff]
    %v61 = vld [vmem:[#allocation2 + $0xe0] sm:$0xff]
    %v62 = vld [vmem:[#allocation2 + $0xe8] sm:$0xff]
    %v63 = vld [vmem:[#allocation2 + $0xf0] sm:$0xff]
    %v64 = vld [vmem:[#allocation2 + $0xf8] sm:$0xff]
    %v65 = vld [vmem:[#allocation2 + $0x100] sm:$0xff]
    %v66 = vld [vmem:[#allocation2 + $0x108] sm:$0xff]
    %v67 = vld [vmem:[#allocation2 + $0x110] sm:$0xff]
    %v68 = vld [vmem:[#allocation2 + $0x118] sm:$0xff]
    %v69 = vld [vmem:[#allocation2 + $0x120] sm:$0xff]
    %v70 = vld [vmem:[#allocation2 + $0x128] sm:$0xff]
    %v71 = vld [vmem:[#allocation2 + $0x130] sm:$0xff]
    %v72 = vld [vmem:[#allocation2 + $0x138] sm:$0xff]
    %v73 = vld [vmem:[#allocation2 + $0x140] sm:$0xff]
    %v74 = vld [vmem:[#allocation2 + $0x148] sm:$0xff]
    %v75 = vld [vmem:[#allocation2 + $0x150] sm:$0xff]
    %v76 = vld [vmem:[#allocation2 + $0x158] sm:$0xff]
    %v77 = vld [vmem:[#allocation2 + $0x160] sm:$0xff]
    %v78 = vld [vmem:[#allocation2 + $0x168] sm:$0xff]
    %v79 = vld [vmem:[#allocation2 + $0x170] sm:$0xff]
    %v80 = vld [vmem:[#allocation2 + $0x178] sm:$0xff]
    %v81 = vld [vmem:[#allocation2 + $0x180] sm:$0xff]
    %v82 = vld [vmem:[#allocation2 + $0x188] sm:$0xff]
    %v83 = vld [vmem:[#allocation2 + $0x190] sm:$0xff]
    %v84 = vld [vmem:[#allocation2 + $0x198] sm:$0xff]
    %v85 = vld [vmem:[#allocation2 + $0x1a0] sm:$0xff]
    %v86 = vld [vmem:[#allocation2 + $0x1a8] sm:$0xff]
    %v87 = vld [vmem:[#allocation2 + $0x1b0] sm:$0xff]
    %v88 = vld [vmem:[#allocation2 + $0x1b8] sm:$0xff]
    %v89 = vld [vmem:[#allocation2 + $0x1c0] sm:$0xff]
    %v90 = vld [vmem:[#allocation2 + $0x1c8] sm:$0xff]
    %v91 = vld [vmem:[#allocation2 + $0x1d0] sm:$0xff]
    %v92 = vld [vmem:[#allocation2 + $0x1d8] sm:$0xff]
    %v93 = vld [vmem:[#allocation2 + $0x1e0] sm:$0xff]
    %v94 = vld [vmem:[#allocation2 + $0x1e8] sm:$0xff]
    %v95 = vld [vmem:[#allocation2 + $0x1f0] sm:$0xff]
    %v96 = vld [vmem:[#allocation2 + $0x1f8] sm:$0xff]
    %v97 = vld [vmem:[%s3] sm:$0xf]
    %v98 = vpack.c.bf16 %v31, %v31
    %v99 = vpack.c.bf16 %v32, %v32
    %v101 = vlaneseq
    %v102 = vshrl.u32 %v101, 7
    %v103 = vsub.s32 0, %v102
    %v104 = vrot.slane %v97, %v103
    %v105 = vlaneseq
    %v106 = vshrl.u32 %v105, 7
    %v107 = vsub.s32 1, %v106
    %v108 = vrot.slane %v97, %v107
    %v109 = vlaneseq
    %v110 = vshrl.u32 %v109, 7
    %v111 = vsub.s32 2, %v110
    %v112 = vrot.slane %v97, %v111
    %v113 = vlaneseq
    %v114 = vshrl.u32 %v113, 7
    %v115 = vsub.s32 3, %v114
    %v116 = vrot.slane %v97, %v115
    %v185 = vunpack.c.l.b16 %v33
    %v186 = vunpack.c.h.b16 %v33
    %v187 = vunpack.c.l.b16 %v34
    %v188 = vunpack.c.h.b16 %v34
    %v189 = vunpack.c.l.b16 %v35
    %v190 = vunpack.c.h.b16 %v35
    %v191 = vunpack.c.l.b16 %v36
    %v192 = vunpack.c.h.b16 %v36
    %v193 = vunpack.c.l.b16 %v37
    %v194 = vunpack.c.h.b16 %v37
    %v195 = vunpack.c.l.b16 %v38
    %v196 = vunpack.c.h.b16 %v38
    %v197 = vunpack.c.l.b16 %v39
    %v198 = vunpack.c.h.b16 %v39
    %v199 = vunpack.c.l.b16 %v40
    %v200 = vunpack.c.h.b16 %v40
    %v201 = vunpack.c.l.b16 %v41
    %v202 = vunpack.c.h.b16 %v41
    %v203 = vunpack.c.l.b16 %v42
    %v204 = vunpack.c.h.b16 %v42
    %v205 = vunpack.c.l.b16 %v43
    %v206 = vunpack.c.h.b16 %v43
    %v207 = vunpack.c.l.b16 %v44
    %v208 = vunpack.c.h.b16 %v44
    %v209 = vunpack.c.l.b16 %v45
    %v210 = vunpack.c.h.b16 %v45
    %v211 = vunpack.c.l.b16 %v46
    %v212 = vunpack.c.h.b16 %v46
    %v213 = vunpack.c.l.b16 %v47
    %v214 = vunpack.c.h.b16 %v47
    %v215 = vunpack.c.l.b16 %v48
    %v216 = vunpack.c.h.b16 %v48
    %v217 = vunpack.c.l.b16 %v49
    %v218 = vunpack.c.h.b16 %v49
    %v219 = vunpack.c.l.b16 %v50
    %v220 = vunpack.c.h.b16 %v50
    %v221 = vunpack.c.l.b16 %v51
    %v222 = vunpack.c.h.b16 %v51
    %v223 = vunpack.c.l.b16 %v52
    %v224 = vunpack.c.h.b16 %v52
    %v225 = vunpack.c.l.b16 %v53
    %v226 = vunpack.c.h.b16 %v53
    %v227 = vunpack.c.l.b16 %v54
    %v228 = vunpack.c.h.b16 %v54
    %v229 = vunpack.c.l.b16 %v55
    %v230 = vunpack.c.h.b16 %v55
    %v231 = vunpack.c.l.b16 %v56
    %v232 = vunpack.c.h.b16 %v56
    %v233 = vunpack.c.l.b16 %v57
    %v234 = vunpack.c.h.b16 %v57
    %v235 = vunpack.c.l.b16 %v58
    %v236 = vunpack.c.h.b16 %v58
    %v237 = vunpack.c.l.b16 %v59
    %v238 = vunpack.c.h.b16 %v59
    %v239 = vunpack.c.l.b16 %v60
    %v240 = vunpack.c.h.b16 %v60
    %v241 = vunpack.c.l.b16 %v61
    %v242 = vunpack.c.h.b16 %v61
    %v243 = vunpack.c.l.b16 %v62
    %v244 = vunpack.c.h.b16 %v62
    %v245 = vunpack.c.l.b16 %v63
    %v246 = vunpack.c.h.b16 %v63
    %v247 = vunpack.c.l.b16 %v64
    %v248 = vunpack.c.h.b16 %v64
    %v249 = vunpack.c.l.b16 %v65
    %v250 = vunpack.c.h.b16 %v65
    %v251 = vunpack.c.l.b16 %v66
    %v252 = vunpack.c.h.b16 %v66
    %v253 = vunpack.c.l.b16 %v67
    %v254 = vunpack.c.h.b16 %v67
    %v255 = vunpack.c.l.b16 %v68
    %v256 = vunpack.c.h.b16 %v68
    %v257 = vunpack.c.l.b16 %v69
    %v258 = vunpack.c.h.b16 %v69
    %v259 = vunpack.c.l.b16 %v70
    %v260 = vunpack.c.h.b16 %v70
    %v261 = vunpack.c.l.b16 %v71
    %v262 = vunpack.c.h.b16 %v71
    %v263 = vunpack.c.l.b16 %v72
    %v264 = vunpack.c.h.b16 %v72
    %v265 = vunpack.c.l.b16 %v73
    %v266 = vunpack.c.h.b16 %v73
    %v267 = vunpack.c.l.b16 %v74
    %v268 = vunpack.c.h.b16 %v74
    %v269 = vunpack.c.l.b16 %v75
    %v270 = vunpack.c.h.b16 %v75
    %v271 = vunpack.c.l.b16 %v76
    %v272 = vunpack.c.h.b16 %v76
    %v273 = vunpack.c.l.b16 %v77
    %v274 = vunpack.c.h.b16 %v77
    %v275 = vunpack.c.l.b16 %v78
    %v276 = vunpack.c.h.b16 %v78
    %v277 = vunpack.c.l.b16 %v79
    %v278 = vunpack.c.h.b16 %v79
    %v279 = vunpack.c.l.b16 %v80
    %v280 = vunpack.c.h.b16 %v80
    %v281 = vunpack.c.l.b16 %v81
    %v282 = vunpack.c.h.b16 %v81
    %v283 = vunpack.c.l.b16 %v82
    %v284 = vunpack.c.h.b16 %v82
    %v285 = vunpack.c.l.b16 %v83
    %v286 = vunpack.c.h.b16 %v83
    %v287 = vunpack.c.l.b16 %v84
    %v288 = vunpack.c.h.b16 %v84
    %v289 = vunpack.c.l.b16 %v85
    %v290 = vunpack.c.h.b16 %v85
    %v291 = vunpack.c.l.b16 %v86
    %v292 = vunpack.c.h.b16 %v86
    %v293 = vunpack.c.l.b16 %v87
    %v294 = vunpack.c.h.b16 %v87
    %v295 = vunpack.c.l.b16 %v88
    %v296 = vunpack.c.h.b16 %v88
    %v297 = vunpack.c.l.b16 %v89
    %v298 = vunpack.c.h.b16 %v89
    %v299 = vunpack.c.l.b16 %v90
    %v300 = vunpack.c.h.b16 %v90
    %v301 = vunpack.c.l.b16 %v91
    %v302 = vunpack.c.h.b16 %v91
    %v303 = vunpack.c.l.b16 %v92
    %v304 = vunpack.c.h.b16 %v92
    %v305 = vunpack.c.l.b16 %v93
    %v306 = vunpack.c.h.b16 %v93
    %v307 = vunpack.c.l.b16 %v94
    %v308 = vunpack.c.h.b16 %v94
    %v309 = vunpack.c.l.b16 %v95
    %v310 = vunpack.c.h.b16 %v95
    %v311 = vunpack.c.l.b16 %v96
    %v312 = vunpack.c.h.b16 %v96
    %v313 = vpack.c.b16 %v189, %v185
    %v314 = vpack.c.b16 %v190, %v186
    %v315 = vpack.c.b16 %v191, %v187
    %v316 = vpack.c.b16 %v192, %v188
    %v317 = vpack.c.b16 %v197, %v193
    %v318 = vpack.c.b16 %v198, %v194
    %v319 = vpack.c.b16 %v199, %v195
    %v320 = vpack.c.b16 %v200, %v196
    %v321 = vpack.c.b16 %v205, %v201
    %v322 = vpack.c.b16 %v206, %v202
    %v323 = vpack.c.b16 %v207, %v203
    %v324 = vpack.c.b16 %v208, %v204
    %v325 = vpack.c.b16 %v213, %v209
    %v326 = vpack.c.b16 %v214, %v210
    %v327 = vpack.c.b16 %v215, %v211
    %v328 = vpack.c.b16 %v216, %v212
    %v329 = vpack.c.b16 %v221, %v217
    %v330 = vpack.c.b16 %v222, %v218
    %v331 = vpack.c.b16 %v223, %v219
    %v332 = vpack.c.b16 %v224, %v220
    %v333 = vpack.c.b16 %v229, %v225
    %v334 = vpack.c.b16 %v230, %v226
    %v335 = vpack.c.b16 %v231, %v227
    %v336 = vpack.c.b16 %v232, %v228
    %v337 = vpack.c.b16 %v237, %v233
    %v338 = vpack.c.b16 %v238, %v234
    %v339 = vpack.c.b16 %v239, %v235
    %v340 = vpack.c.b16 %v240, %v236
    %v341 = vpack.c.b16 %v245, %v241
    %v342 = vpack.c.b16 %v246, %v242
    %v343 = vpack.c.b16 %v247, %v243
    %v344 = vpack.c.b16 %v248, %v244
    %v345 = vpack.c.b16 %v253, %v249
    %v346 = vpack.c.b16 %v254, %v250
    %v347 = vpack.c.b16 %v255, %v251
    %v348 = vpack.c.b16 %v256, %v252
    %v349 = vpack.c.b16 %v261, %v257
    %v350 = vpack.c.b16 %v262, %v258
    %v351 = vpack.c.b16 %v263, %v259
    %v352 = vpack.c.b16 %v264, %v260
    %v353 = vpack.c.b16 %v269, %v265
    %v354 = vpack.c.b16 %v270, %v266
    %v355 = vpack.c.b16 %v271, %v267
    %v356 = vpack.c.b16 %v272, %v268
    %v357 = vpack.c.b16 %v277, %v273
    %v358 = vpack.c.b16 %v278, %v274
    %v359 = vpack.c.b16 %v279, %v275
    %v360 = vpack.c.b16 %v280, %v276
    %v361 = vpack.c.b16 %v285, %v281
    %v362 = vpack.c.b16 %v286, %v282
    %v363 = vpack.c.b16 %v287, %v283
    %v364 = vpack.c.b16 %v288, %v284
    %v365 = vpack.c.b16 %v293, %v289
    %v366 = vpack.c.b16 %v294, %v290
    %v367 = vpack.c.b16 %v295, %v291
    %v368 = vpack.c.b16 %v296, %v292
    %v369 = vpack.c.b16 %v301, %v297
    %v370 = vpack.c.b16 %v302, %v298
    %v371 = vpack.c.b16 %v303, %v299
    %v372 = vpack.c.b16 %v304, %v300
    %v373 = vpack.c.b16 %v309, %v305
    %v374 = vpack.c.b16 %v310, %v306
    %v375 = vpack.c.b16 %v311, %v307
    %v376 = vpack.c.b16 %v312, %v308
    %441 = vmatprep.subr.bf16.mxu0 %v342
    %442 = vmatpush1.bf16.msra.mxu0 %v341
    %443 = vmatprep.subr.bf16.mxu0 %v338
    %444 = vmatpush1.bf16.msra.mxu0 %v337
    %445 = vmatprep.subr.bf16.mxu0 %v334
    %446 = vmatpush1.bf16.msra.mxu0 %v333
    %447 = vmatprep.subr.bf16.mxu0 %v330
    %448 = vmatpush1.bf16.msra.mxu0 %v329
    %449 = vmatprep.subr.bf16.mxu0 %v326
    %450 = vmatpush1.bf16.msra.mxu0 %v325
    %451 = vmatprep.subr.bf16.mxu0 %v322
    %452 = vmatpush1.bf16.msra.mxu0 %v321
    %453 = vmatprep.subr.bf16.mxu0 %v318
    %454 = vmatpush1.bf16.msra.mxu0 %v317
    %455 = vmatprep.subr.bf16.mxu0 %v314
    %456 = vmatpush1.bf16.msra.mxu0 %v313
    %457 = vmatprep.subr.bf16.mxu0 %v374
    %458 = vmatpush2.bf16.msra.mxu0 %v373
    %459 = vmatprep.subr.bf16.mxu0 %v370
    %460 = vmatpush2.bf16.msra.mxu0 %v369
    %461 = vmatprep.subr.bf16.mxu0 %v366
    %462 = vmatpush2.bf16.msra.mxu0 %v365
    %463 = vmatprep.subr.bf16.mxu0 %v362
    %464 = vmatpush2.bf16.msra.mxu0 %v361
    %465 = vmatprep.subr.bf16.mxu0 %v358
    %466 = vmatpush2.bf16.msra.mxu0 %v357
    %467 = vmatprep.subr.bf16.mxu0 %v354
    %468 = vmatpush2.bf16.msra.mxu0 %v353
    %469 = vmatprep.subr.bf16.mxu0 %v350
    %470 = vmatpush2.bf16.msra.mxu0 %v349
    %471 = vmatprep.subr.bf16.mxu0 %v346
    %472 = vmatpush2.bf16.msra.mxu0 %v345
    %473 = vmatprep.mubr.bf16.mxu0 %v99
    %474 = vmatmul.mubr.bf16.gmra.mxu0 %v98
    %v475 = vpop.f32.mrf.mxu0
    %v476 = vadd.f32 %v104, %v475
    %v477 = vpop.f32.mrf.mxu0
    %v478 = vadd.f32 %v108, %v477
    %v479 = vpop.f32.mrf.mxu0
    %v480 = vpop.f32.mrf.mxu0
    %481 = vdwg.mxu0
    %482 = vmatprep.subr.bf16.mxu0 %v344
    %483 = vmatpush1.bf16.msra.mxu0 %v343
    %484 = vmatprep.subr.bf16.mxu0 %v340
    %485 = vmatpush1.bf16.msra.mxu0 %v339
    %486 = vmatprep.subr.bf16.mxu0 %v336
    %487 = vmatpush1.bf16.msra.mxu0 %v335
    %488 = vmatprep.subr.bf16.mxu0 %v332
    %489 = vmatpush1.bf16.msra.mxu0 %v331
    %490 = vmatprep.subr.bf16.mxu0 %v328
    %491 = vmatpush1.bf16.msra.mxu0 %v327
    %492 = vmatprep.subr.bf16.mxu0 %v324
    %493 = vmatpush1.bf16.msra.mxu0 %v323
    %494 = vmatprep.subr.bf16.mxu0 %v320
    %495 = vmatpush1.bf16.msra.mxu0 %v319
    %496 = vmatprep.subr.bf16.mxu0 %v316
    %497 = vmatpush1.bf16.msra.mxu0 %v315
    %498 = vmatprep.subr.bf16.mxu0 %v376
    %499 = vmatpush2.bf16.msra.mxu0 %v375
    %500 = vmatprep.subr.bf16.mxu0 %v372
    %501 = vmatpush2.bf16.msra.mxu0 %v371
    %502 = vmatprep.subr.bf16.mxu0 %v368
    %503 = vmatpush2.bf16.msra.mxu0 %v367
    %504 = vmatprep.subr.bf16.mxu0 %v364
    %505 = vmatpush2.bf16.msra.mxu0 %v363
    %506 = vmatprep.subr.bf16.mxu0 %v360
    %507 = vmatpush2.bf16.msra.mxu0 %v359
    %508 = vmatprep.subr.bf16.mxu0 %v356
    %509 = vmatpush2.bf16.msra.mxu0 %v355
    %510 = vmatprep.subr.bf16.mxu0 %v352
    %511 = vmatpush2.bf16.msra.mxu0 %v351
    %512 = vmatprep.subr.bf16.mxu0 %v348
    %513 = vmatpush2.bf16.msra.mxu0 %v347
    %514 = vmatprep.mubr.bf16.mxu0 %v99
    %515 = vmatmul.mubr.bf16.gmra.mxu0 %v98
    %v516 = vpop.f32.mrf.mxu0
    %v517 = vadd.f32 %v112, %v516
    %v518 = vpop.f32.mrf.mxu0
    %v519 = vadd.f32 %v116, %v518
    %v520 = vpop.f32.mrf.mxu0
    %v521 = vpop.f32.mrf.mxu0
    %522 = vdwg.mxu0
    %v523 = vxor.u32 %v476, 2147483648
    %v524 = vmul.f32 %v523, 1.442695
    %v525 = vpow.pop %v524
    %v526 = vadd.f32 %v525, 1.0
    %v527 = vrcp.pop %v526
    %v528 = vmul.f32 1.0, %v527
    %v529 = vxor.u32 %v478, 2147483648
    %v530 = vmul.f32 %v529, 1.442695
    %v531 = vpow.pop %v530
    %v532 = vadd.f32 %v531, 1.0
    %v533 = vrcp.pop %v532
    %v534 = vmul.f32 1.0, %v533
    %v535 = vmul.f32 %v528, %v519
    %v536 = vadd.f32 %v517, %v535
    %v537 = vtanh.pop %v536
    %v538 = vsub.f32 1.0, %v534
    %v539 = vmul.f32 %v538, %v537
    %v540 = vmul.f32 %v534, %v32
    %v541 = vadd.f32 %v539, %v540
    %542 = vst [vmem:[%s4] sm:$0xff] %v541
    // Predicated region
    $region22: #{gru4rec_forward.1} parent=1 // pred_check
      _
    $region23: #{gru4rec_forward.1} parent=1 // pred_check_branch
      %544 = sbr.rel (0) target = $region25
    $region24: #{gru4rec_forward.1} parent=1 // pred_region
      _
    $region25: #{gru4rec_forward.1} parent=1 // pred_fallthru
      _
    // Predicated region
    $region26: #{gru4rec_forward.1} parent=1 // pred_check
      _
    $region27: #{gru4rec_forward.1} parent=1 // pred_check_branch
      %546 = sbr.rel (0) target = $region29
    $region28: #{gru4rec_forward.1} parent=1 // pred_region
      _
    $region29: #{gru4rec_forward.1} parent=1 // pred_fallthru
      _
    %547 = vsyncpa [#allocation3], 1

</llo_original>
